<compile_context>
chip_gen: v6e
topology: v6e:2x2x1
jax: 0.10.0
libtpu: 0.0.40
codegen_flags: <defaults>
</compile_context>

<pallas_src>
import functools

import jax
import jax.numpy as jnp
import numpy as np
from jax.experimental import pallas as pl
from jax.experimental.pallas import tpu as pltpu


def _round_up(x, m):
    return (x + m - 1) // m * m


def _fdfir_kernel(Kp, lhs_ref, bcos_ref, bsin_ref, binv_ref, o_ref):
    # lhs_ref:  (tile, NF+M1)  bf16   [windowless frames | cepstra]
    # bcos/bsin:(NF+M1, 2*Kp)  bf16   block-diag stacked forward bases (window folded in)
    # binv:     (2*Kp, NFp)    bf16   stacked inverse basis (synthesis window folded in)
    L = lhs_ref[...]

    # Fused forward matmuls (single MXU pass each, f32 accumulation).
    Rc = jnp.dot(L, bcos_ref[...], preferred_element_type=jnp.float32)   # [Xr | Lr]
    Rs = jnp.dot(L, bsin_ref[...], preferred_element_type=jnp.float32)   # [-Xi | -Li]

    Xr = Rc[:, :Kp]
    Lr = Rc[:, Kp:]
    Xi = -Rs[:, :Kp]
    Li = -Rs[:, Kp:]

    # mgc2sp (alpha=gamma=0, out_format='complex'): H = exp(Lr + j*Li)
    mag = jnp.exp(Lr)
    Hr = mag * jnp.cos(Li)
    Hi = mag * jnp.sin(Li)

    # Y = H * X  (complex multiply).  Padded bins (k >= K): X = 0 -> Y = 0, and
    # the corresponding rows of binv are zero, so they contribute nothing.
    Yr = Hr * Xr - Hi * Xi
    Yi = Hr * Xi + Hi * Xr

    # Fused irfft + crop + synthesis window, one matmul, lane-dense store.
    Y = jnp.concatenate([Yr, Yi], axis=-1).astype(jnp.bfloat16)          # (tile, 2*Kp)
    o_ref[...] = jnp.dot(Y, binv_ref[...],
                         preferred_element_type=jnp.float32).astype(o_ref.dtype)


def fdfir_frames(lhs, bcos, bsin, binv, Kp, tile):
    BT, D = lhs.shape
    NFp = binv.shape[1]
    grid = (BT // tile,)
    kernel = functools.partial(_fdfir_kernel, Kp)
    return pl.pallas_call(
        kernel,
        out_shape=jax.ShapeDtypeStruct((BT, NFp), jnp.float32),
        grid_spec=pltpu.PrefetchScalarGridSpec(
            num_scalar_prefetch=0,
            grid=grid,
            in_specs=[
                pl.BlockSpec((tile, D), lambda i: (i, 0)),        # [frames | cep]
                pl.BlockSpec(bcos.shape, lambda i: (0, 0)),       # stacked cos basis
                pl.BlockSpec(bsin.shape, lambda i: (0, 0)),       # stacked sin basis
                pl.BlockSpec(binv.shape, lambda i: (0, 0)),       # stacked inverse basis
            ],
            out_specs=pl.BlockSpec((tile, NFp), lambda i: (i, 0)),
        ),
        compiler_params=pltpu.CompilerParams(
            dimension_semantics=("parallel",),
            vmem_limit_bytes=48 * 1024 * 1024),
    )(lhs, bcos, bsin, binv)


def _blackman_window(NF):
    n = np.arange(NF, dtype=np.float64)
    w = (0.42 - 0.5 * np.cos(2 * np.pi * n / (NF - 1))
         + 0.08 * np.cos(4 * np.pi * n / (NF - 1)))
    return w / np.sqrt(np.sum(w * w))          # power-normalized: sum w^2 = 1


def _make_bases(frame_length, fft_length, M1):
    NF, NFFT = frame_length, fft_length
    K = NFFT // 2 + 1
    Kp = _round_up(K, 128)                     # lane-dense spectral axis
    NFp = _round_up(NF, 128)                   # lane-dense output axis
    D = NF + M1

    n = np.arange(NF, dtype=np.float64)
    kk = np.arange(K, dtype=np.float64)
    mm = np.arange(M1, dtype=np.float64)
    w = _blackman_window(NF)

    # Forward DFT bases; analysis window folded into the frame rows.
    ang_f = 2.0 * np.pi * np.outer(n, kk) / NFFT           # (NF, K)
    cosF = w[:, None] * np.cos(ang_f)
    sinF = w[:, None] * np.sin(ang_f)
    ang_c = 2.0 * np.pi * np.outer(mm, kk) / NFFT          # (M1, K)
    cosC = np.cos(ang_c)
    sinC = np.sin(ang_c)

    # Block-diagonal stacking so one matmul produces [Xr | Lr] (resp. [-Xi | -Li]).
    bcos = np.zeros((D, 2 * Kp), np.float32)
    bsin = np.zeros((D, 2 * Kp), np.float32)
    bcos[:NF, :K] = cosF
    bcos[NF:, Kp:Kp + K] = cosC
    bsin[:NF, :K] = sinF
    bsin[NF:, Kp:Kp + K] = sinC

    # Inverse (irfft, crop to NF) basis; synthesis window folded into the columns.
    alpha = np.where((kk == 0) | (kk == NFFT // 2), 1.0, 2.0)
    ang_i = 2.0 * np.pi * np.outer(kk, n) / NFFT           # (K, NF)
    icos = alpha[:, None] * np.cos(ang_i) / NFFT * w[None, :]
    isin = alpha[:, None] * np.sin(ang_i) / NFFT * w[None, :]
    binv = np.zeros((2 * Kp, NFp), np.float32)             # padded rows/cols stay zero
    binv[:K, :NF] = icos
    binv[Kp:Kp + K, :NF] = -isin

    return (jnp.asarray(w, jnp.float32),
            jnp.asarray(bcos, jnp.bfloat16),
            jnp.asarray(bsin, jnp.bfloat16),
            jnp.asarray(binv, jnp.bfloat16),
            Kp, NFp)


def frequency_domain_fir_filter(x, mc, *, frame_length, frame_period, fft_length,
                                max_tile=1024):
    B, L = x.shape
    _, T, M1 = mc.shape
    NF, fp = frame_length, frame_period
    half = NF // 2

    w, bcos, bsin, binv, Kp, NFp = _make_bases(NF, fft_length, M1)

    # --- framing (glue: gather) ---
    xp = jnp.pad(x, ((0, 0), (half, half)))
    idx = jnp.arange(T)[:, None] * fp + jnp.arange(NF)[None, :]        # (T, NF)
    frames = xp[:, idx]                                                # (B, T, NF)
    BT = B * T
    lhs = jnp.concatenate(
        [frames.reshape(BT, NF), mc.reshape(BT, M1)], axis=-1).astype(jnp.bfloat16)

    # Adaptive row tile (kept a multiple of 8; large tiles keep the MXU busy and
    # amortize per-grid-step overhead).  Zero-padded rows produce X=0, H=exp(0)=1,
    # hence zero output rows that are sliced off below.
    tile = min(max_tile, _round_up(BT, 8))
    BTp = _round_up(BT, tile)
    if BTp != BT:
        lhs = jnp.pad(lhs, ((0, BTp - BT), (0, 0)))

    # --- hot path: Pallas kernel ---
    yf = fdfir_frames(lhs, bcos, bsin, binv, Kp, tile)
    yf = yf[:BT, :NF].reshape(B, T, NF)

    # --- overlap-add / window^2 normalization / crop (glue: scatter-add) ---
    Lp = L + 2 * half
    flat_idx = idx.reshape(-1)
    num = jnp.zeros((B, Lp), jnp.float32).at[:, flat_idx].add(yf.reshape(B, -1))
    den = jnp.zeros((Lp,), jnp.float32).at[flat_idx].add(
        jnp.broadcast_to(w * w, (T, NF)).reshape(-1))
    y = num / jnp.maximum(den, 1e-10)
    return y[:, half:half + L]


def reference(x, mc, *, frame_length, frame_period, fft_length):
    """Pure-JAX reference using jnp.fft (same window / framing / OLA)."""
    B, L = x.shape
    _, T, M1 = mc.shape
    NF, fp, NFFT = frame_length, frame_period, fft_length
    half = NF // 2
    w = jnp.asarray(_blackman_window(NF), jnp.float32)

    xp = jnp.pad(x, ((0, 0), (half, half)))
    idx = jnp.arange(T)[:, None] * fp + jnp.arange(NF)[None, :]
    frames = xp[:, idx]
    X = jnp.fft.rfft(frames * w, n=NFFT, axis=-1)
    H = jnp.exp(jnp.fft.rfft(mc, n=NFFT, axis=-1))
    Y = H * X
    yf = jnp.fft.irfft(Y, n=NFFT, axis=-1)[..., :NF] * w

    Lp = L + 2 * half
    flat_idx = idx.reshape(-1)
    num = jnp.zeros((B, Lp), jnp.float32).at[:, flat_idx].add(yf.reshape(B, -1))
    den = jnp.zeros((Lp,), jnp.float32).at[flat_idx].add(
        jnp.broadcast_to(w * w, (T, NF)).reshape(-1))
    y = num / jnp.maximum(den, 1e-10)
    return y[:, half:half + L]


if __name__ == "__main__":
    B, L = 2, 240
    frame_length, frame_period, fft_length = 64, 16, 128   # frame_length > 2*frame_period
    M = 15                                                  # filter_order
    T = L // frame_period + 1                               # STFT frames (center=True)

    key = jax.random.PRNGKey(0)
    k1, k2 = jax.random.split(key)
    x = jax.random.normal(k1, (B, L), jnp.float32)
    mc = 0.1 * jax.random.normal(k2, (B, T, M + 1), jnp.float32)

    y = frequency_domain_fir_filter(
        x, mc, frame_length=frame_length, frame_period=frame_period,
        fft_length=fft_length)
    y = jax.block_until_ready(y)

    y_ref = jax.block_until_ready(
        reference(x, mc, frame_length=frame_length, frame_period=frame_period,
                  fft_length=fft_length))

    assert y.shape == (B, L)
    assert bool(jnp.all(jnp.isfinite(y)))
    err = float(jnp.max(jnp.abs(y - y_ref)))
    scale = float(jnp.max(jnp.abs(y_ref))) + 1e-6
    assert err <= 5e-2 * scale, f"mismatch: max_err={err} scale={scale}"
    print("KERNEL_OK")
</pallas_src>

<mosaic_0001>
module attributes {stable_mosaic.version = 11 : i64} {
  func.func @_fdfir_kernel(%arg0: i32, %arg1: memref<32x80xbf16, #tpu.memory_space<vmem>>, %arg2: memref<80x256xbf16, #tpu.memory_space<vmem>>, %arg3: memref<80x256xbf16, #tpu.memory_space<vmem>>, %arg4: memref<256x128xbf16, #tpu.memory_space<vmem>>, %arg5: memref<32x128xf32, #tpu.memory_space<vmem>>) attributes {dimension_semantics = [#tpu.dimension_semantics<parallel>], iteration_bounds = array<i64: 1>, scalar_prefetch = 0 : i64, scratch_operands = 0 : i64, tpu.core_type = #tpu.core_type<tc>, window_params = [{transform_indices = @transform_0, window_bounds = array<i64: 32, 80>}, {pipeline_mode = #tpu.pipeline_mode<synchronous>, transform_indices = @transform_1, window_bounds = array<i64: 80, 256>}, {pipeline_mode = #tpu.pipeline_mode<synchronous>, transform_indices = @transform_2, window_bounds = array<i64: 80, 256>}, {pipeline_mode = #tpu.pipeline_mode<synchronous>, transform_indices = @transform_3, window_bounds = array<i64: 256, 128>}, {transform_indices = @transform_4, window_bounds = array<i64: 32, 128>}]} {
    %c0 = arith.constant 0 : index
    %c0_0 = arith.constant 0 : index
    %0 = vector.load %arg1[%c0, %c0_0] : memref<32x80xbf16, #tpu.memory_space<vmem>>, vector<32x80xbf16>
    %c0_1 = arith.constant 0 : index
    %c0_2 = arith.constant 0 : index
    %1 = vector.load %arg2[%c0_1, %c0_2] : memref<80x256xbf16, #tpu.memory_space<vmem>>, vector<80x256xbf16>
    %cst = arith.constant dense<0.000000e+00> : vector<32x256xf32>
    %2 = tpu.matmul %0, %1, %cst {dimension_numbers = #tpu.dot_dimension_numbers<[1], [0], [0], [1], [0, 0, 1, 1], [], []>} : vector<32x80xbf16>, vector<80x256xbf16>, vector<32x256xf32> -> vector<32x256xf32>
    %c0_3 = arith.constant 0 : index
    %c0_4 = arith.constant 0 : index
    %3 = vector.load %arg3[%c0_3, %c0_4] : memref<80x256xbf16, #tpu.memory_space<vmem>>, vector<80x256xbf16>
    %cst_5 = arith.constant dense<0.000000e+00> : vector<32x256xf32>
    %4 = tpu.matmul %0, %3, %cst_5 {dimension_numbers = #tpu.dot_dimension_numbers<[1], [0], [0], [1], [0, 0, 1, 1], [], []>} : vector<32x80xbf16>, vector<80x256xbf16>, vector<32x256xf32> -> vector<32x256xf32>
    %5 = vector.extract_strided_slice %2 {offsets = [0, 0], sizes = [32, 128], strides = [1, 1]} : vector<32x256xf32> to vector<32x128xf32>
    %6 = vector.extract_strided_slice %2 {offsets = [0, 128], sizes = [32, 128], strides = [1, 1]} : vector<32x256xf32> to vector<32x128xf32>
    %7 = vector.extract_strided_slice %4 {offsets = [0, 0], sizes = [32, 128], strides = [1, 1]} : vector<32x256xf32> to vector<32x128xf32>
    %cst_6 = arith.constant 0.000000e+00 : f32
    %8 = vector.broadcast %cst_6 : f32 to vector<32x128xf32>
    %9 = arith.subf %8, %7 : vector<32x128xf32>
    %10 = vector.extract_strided_slice %4 {offsets = [0, 128], sizes = [32, 128], strides = [1, 1]} : vector<32x256xf32> to vector<32x128xf32>
    %cst_7 = arith.constant 0.000000e+00 : f32
    %11 = vector.broadcast %cst_7 : f32 to vector<32x128xf32>
    %12 = arith.subf %11, %10 : vector<32x128xf32>
    %13 = math.exp %6 : vector<32x128xf32>
    %14 = math.cos %12 : vector<32x128xf32>
    %15 = arith.mulf %13, %14 : vector<32x128xf32>
    %16 = math.sin %12 : vector<32x128xf32>
    %17 = arith.mulf %13, %16 : vector<32x128xf32>
    %18 = arith.mulf %15, %5 : vector<32x128xf32>
    %19 = arith.mulf %17, %9 : vector<32x128xf32>
    %20 = arith.subf %18, %19 : vector<32x128xf32>
    %21 = arith.mulf %15, %9 : vector<32x128xf32>
    %22 = arith.mulf %17, %5 : vector<32x128xf32>
    %23 = arith.addf %21, %22 : vector<32x128xf32>
    %24 = tpu.concatenate %20, %23 in 1 : vector<32x128xf32>, vector<32x128xf32> -> vector<32x256xf32>
    %25 = arith.truncf %24 : vector<32x256xf32> to vector<32x256xbf16>
    %c0_8 = arith.constant 0 : index
    %c0_9 = arith.constant 0 : index
    %26 = vector.load %arg4[%c0_8, %c0_9] : memref<256x128xbf16, #tpu.memory_space<vmem>>, vector<256x128xbf16>
    %cst_10 = arith.constant dense<0.000000e+00> : vector<32x128xf32>
    %27 = tpu.matmul %25, %26, %cst_10 {dimension_numbers = #tpu.dot_dimension_numbers<[1], [0], [0], [1], [0, 0, 1, 1], [], []>} : vector<32x256xbf16>, vector<256x128xbf16>, vector<32x128xf32> -> vector<32x128xf32>
    %c0_11 = arith.constant 0 : index
    %c0_12 = arith.constant 0 : index
    %28 = vector.load %arg5[%c0_11, %c0_12] : memref<32x128xf32, #tpu.memory_space<vmem>>, vector<32x128xf32>
    tpu.vector_store %arg5[%c0_11, %c0_12], %27 {strides = array<i32>} : memref<32x128xf32, #tpu.memory_space<vmem>>, vector<32x128xf32>,
    return
  }
  func.func @transform_0(%arg0: i32) -> (i32, i32) {
    %c0_i32 = arith.constant 0 : i32
    %c0_i32_0 = arith.constant 0 : i32
    return %arg0, %c0_i32 : i32, i32
  }
  func.func @transform_1(%arg0: i32) -> (i32, i32) {
    %c0_i32 = arith.constant 0 : i32
    %c0_i32_0 = arith.constant 0 : i32
    %c0_i32_1 = arith.constant 0 : i32
    return %c0_i32, %c0_i32_0 : i32, i32
  }
  func.func @transform_2(%arg0: i32) -> (i32, i32) {
    %c0_i32 = arith.constant 0 : i32
    %c0_i32_0 = arith.constant 0 : i32
    %c0_i32_1 = arith.constant 0 : i32
    return %c0_i32, %c0_i32_0 : i32, i32
  }
  func.func @transform_3(%arg0: i32) -> (i32, i32) {
    %c0_i32 = arith.constant 0 : i32
    %c0_i32_0 = arith.constant 0 : i32
    %c0_i32_1 = arith.constant 0 : i32
    return %c0_i32, %c0_i32_0 : i32, i32
  }
  func.func @transform_4(%arg0: i32) -> (i32, i32) {
    %c0_i32 = arith.constant 0 : i32
    %c0_i32_0 = arith.constant 0 : i32
    return %arg0, %c0_i32 : i32, i32
  }
}

</mosaic_0001>

<llo_original>
// kernel: tpu_custom_call.1
$region0: #{tpu_custom_call.1}
  #allocation0 [shape = 'u32[]', space=smem, size = 0x4, offset = 0x4, fixed_abs, tag = 'smem constant byte address 0x4 - core index']
  #allocation1 [shape = 'u32[144,128]{1,0:T(1,128)}', space=vmem, size = 0x12000, scoped, tag = 'internal scratch']
  %s0 = inlined_call_operand.hbm [shape: bf16[32,80], index: 0, kind: input, shape index: {}]
  %s1 = inlined_call_operand.hbm [shape: bf16[80,256], index: 1, kind: input, shape index: {}]
  %s2 = inlined_call_operand.hbm [shape: bf16[80,256], index: 2, kind: input, shape index: {}]
  %s3 = inlined_call_operand.hbm [shape: bf16[256,128], index: 3, kind: input, shape index: {}]
  %s4 = inlined_call_operand.hbm [shape: f32[32,128], index: 4, kind: output, shape index: {}]
  %s5 = sld [smem:[#allocation0]]
  $region42: #{tpu_custom_call.1} parent=0
    _
  %s7 = ssub.s32 1, %s5
  %s8 = scalar_select 0, %s7, %s5
  $region1: #{tpu_custom_call.1} parent=0
    #allocation2 [shape = 'u8[8192]{0}', space=vmem, size = 0x2000, scoped, tag = 'input window, operand 0, single buffered']
    #allocation3 [shape = 's32[1]{0}', space=sflag, size = 0x4, scoped, tag = 'scoped memory for tpu_custom_call.1']
    #allocation4 [shape = 's32[1]{0}', space=sflag, size = 0x4, scoped, tag = 'scoped memory for tpu_custom_call.1']
    #allocation5 [shape = 'u8[40960]{0}', space=vmem, size = 0xa000, scoped, tag = 'input window, operand 1, single buffered']
    #allocation6 [shape = 's32[1]{0}', space=sflag, size = 0x4, scoped, tag = 'scoped memory for tpu_custom_call.1']
    #allocation7 [shape = 'u8[40960]{0}', space=vmem, size = 0xa000, scoped, tag = 'input window, operand 2, single buffered']
    #allocation8 [shape = 'u8[65536]{0}', space=vmem, size = 0x10000, scoped, tag = 'input window, operand 3, single buffered']
    #allocation9 [shape = 's32[1]{0}', space=sflag, size = 0x4, scoped, tag = 'scoped memory for tpu_custom_call.1']
    #allocation10 [shape = 'u8[16384]{0}', space=vmem, size = 0x4000, scoped, tag = 'output window, operand 0, single buffered']
    %9 = vsyncpa [#allocation3], 0
    %10 = vsyncpa [#allocation6], 0
    %11 = vsyncpa [#allocation9], 0
    %12 = vsyncpa [#allocation4], 0
    // Predicated region
    $region2: #{tpu_custom_call.1} parent=1 // pred_check
      _
    $region3: #{tpu_custom_call.1} parent=1 // pred_check_branch
      %14 = sbr.rel (0) target = $region5
    $region4: #{tpu_custom_call.1} parent=1 // pred_region
      %s16 = ssub.s32 256, 256
      %17 = vsyncadd [#allocation3], %s16
      %s18 = sshll.u32 [#allocation2], 4
      %s19 = int_to_ptr.vmem [resolvable:$true] %s18
      %24 = dma.hbm_to_vmem [thread:$0]  %s0, 256, %s19, [#allocation3], 64, 64, 4
    $region5: #{tpu_custom_call.1} parent=1 // pred_fallthru
      _
    // Predicated region
    $region6: #{tpu_custom_call.1} parent=1 // pred_check
      _
    $region7: #{tpu_custom_call.1} parent=1 // pred_check_branch
      %26 = sbr.rel (0) target = $region9
    $region8: #{tpu_custom_call.1} parent=1 // pred_region
      %s28 = ssub.s32 1280, 1280
      %29 = vsyncadd [#allocation6], %s28
      %s30 = sshll.u32 [#allocation5], 4
      %s31 = int_to_ptr.vmem [resolvable:$true] %s30
      %36 = dma.hbm_to_vmem [thread:$0]  %s1, 1280, %s31, [#allocation6], 128, 128, 8
    $region9: #{tpu_custom_call.1} parent=1 // pred_fallthru
      _
    // Predicated region
    $region10: #{tpu_custom_call.1} parent=1 // pred_check
      _
    $region11: #{tpu_custom_call.1} parent=1 // pred_check_branch
      %38 = sbr.rel (0) target = $region13
    $region12: #{tpu_custom_call.1} parent=1 // pred_region
      %s40 = ssub.s32 1280, 1280
      %41 = vsyncadd [#allocation6], %s40
      %s42 = sshll.u32 [#allocation7], 4
      %s43 = int_to_ptr.vmem [resolvable:$true] %s42
      %48 = dma.hbm_to_vmem [thread:$0]  %s2, 1280, %s43, [#allocation6], 128, 128, 8
    $region13: #{tpu_custom_call.1} parent=1 // pred_fallthru
      _
    // Predicated region
    $region14: #{tpu_custom_call.1} parent=1 // pred_check
      _
    $region15: #{tpu_custom_call.1} parent=1 // pred_check_branch
      %50 = sbr.rel (0) target = $region17
    $region16: #{tpu_custom_call.1} parent=1 // pred_region
      %s52 = ssub.s32 2048, 2048
      %53 = vsyncadd [#allocation9], %s52
      %s54 = sshll.u32 [#allocation8], 4
      %s55 = int_to_ptr.vmem [resolvable:$true] %s54
      %60 = dma.hbm_to_vmem [thread:$0]  %s3, 2048, %s55, [#allocation9], 64, 64, 4
    $region17: #{tpu_custom_call.1} parent=1 // pred_fallthru
      _
    // Predicated region
    $region18: #{tpu_custom_call.1} parent=1 // pred_check
      _
    $region19: #{tpu_custom_call.1} parent=1 // pred_check_branch
      %62 = sbr.rel (0) target = $region21
    $region20: #{tpu_custom_call.1} parent=1 // pred_region
      %63 = dma.done [#allocation3], 256
    $region21: #{tpu_custom_call.1} parent=1 // pred_fallthru
      _
    // Predicated region
    $region22: #{tpu_custom_call.1} parent=1 // pred_check
      _
    $region23: #{tpu_custom_call.1} parent=1 // pred_check_branch
      %65 = sbr.rel (0) target = $region25
    $region24: #{tpu_custom_call.1} parent=1 // pred_region
      %66 = dma.done [#allocation6], 1280
    $region25: #{tpu_custom_call.1} parent=1 // pred_fallthru
      _
    // Predicated region
    $region26: #{tpu_custom_call.1} parent=1 // pred_check
      _
    $region27: #{tpu_custom_call.1} parent=1 // pred_check_branch
      %68 = sbr.rel (0) target = $region29
    $region28: #{tpu_custom_call.1} parent=1 // pred_region
      %69 = dma.done [#allocation6], 1280
    $region29: #{tpu_custom_call.1} parent=1 // pred_fallthru
      _
    // Predicated region
    $region30: #{tpu_custom_call.1} parent=1 // pred_check
      _
    $region31: #{tpu_custom_call.1} parent=1 // pred_check_branch
      %71 = sbr.rel (0) target = $region33
    $region32: #{tpu_custom_call.1} parent=1 // pred_region
      %72 = dma.done [#allocation9], 2048
    $region33: #{tpu_custom_call.1} parent=1 // pred_fallthru
      _
    %v74 = vld [vmem:[#allocation2] sm:$0xf]
    %v75 = vld [vmem:[#allocation2 + $0x4] sm:$0xf]
    %v76 = vld [vmem:[#allocation2 + $0x8] sm:$0xf]
    %v77 = vld [vmem:[#allocation2 + $0xc] sm:$0xf]
    %v78 = vld [vmem:[#allocation5] sm:$0xff]
    %v79 = vld [vmem:[#allocation5 + $0x8] sm:$0xff]
    %v80 = vld [vmem:[#allocation5 + $0x10] sm:$0xff]
    %v81 = vld [vmem:[#allocation5 + $0x18] sm:$0xff]
    %v82 = vld [vmem:[#allocation5 + $0x20] sm:$0xff]
    %v83 = vld [vmem:[#allocation5 + $0x28] sm:$0xff]
    %v84 = vld [vmem:[#allocation5 + $0x30] sm:$0xff]
    %v85 = vld [vmem:[#allocation5 + $0x38] sm:$0xff]
    %v86 = vld [vmem:[#allocation5 + $0x40] sm:$0xff]
    %v87 = vld [vmem:[#allocation5 + $0x48] sm:$0xff]
    %v92 = vunpack.c.l.b16 %v74
    %v93 = vunpack.c.l.b16 %v75
    %v94 = vunpack.c.l.b16 %v76
    %v95 = vunpack.c.l.b16 %v77
    %v96 = vpack.c.b16 %v93, %v92
    %v97 = vpack.c.b16 %v95, %v94
    %v108 = vunpack.c.l.b16 %v78
    %v109 = vunpack.c.h.b16 %v78
    %v110 = vunpack.c.l.b16 %v79
    %v111 = vunpack.c.h.b16 %v79
    %v112 = vunpack.c.l.b16 %v80
    %v113 = vunpack.c.h.b16 %v80
    %v114 = vunpack.c.l.b16 %v81
    %v115 = vunpack.c.h.b16 %v81
    %v116 = vunpack.c.l.b16 %v82
    %v117 = vunpack.c.h.b16 %v82
    %v118 = vunpack.c.l.b16 %v83
    %v119 = vunpack.c.h.b16 %v83
    %v120 = vunpack.c.l.b16 %v84
    %v121 = vunpack.c.h.b16 %v84
    %v122 = vunpack.c.l.b16 %v85
    %v123 = vunpack.c.h.b16 %v85
    %v124 = vunpack.c.l.b16 %v86
    %v125 = vunpack.c.h.b16 %v86
    %v126 = vunpack.c.l.b16 %v87
    %v127 = vunpack.c.h.b16 %v87
    %v128 = vpack.c.b16 %v110, %v108
    %v129 = vpack.c.b16 %v111, %v109
    %v130 = vpack.c.b16 %v114, %v112
    %v131 = vpack.c.b16 %v115, %v113
    %v132 = vpack.c.b16 %v118, %v116
    %v133 = vpack.c.b16 %v119, %v117
    %v134 = vpack.c.b16 %v122, %v120
    %v135 = vpack.c.b16 %v123, %v121
    %v136 = vpack.c.b16 %v126, %v124
    %v137 = vpack.c.b16 %v127, %v125
    %vm148 = vcmask 654336
    %v150 = vsel %vm148, %v96, 0
    %v153 = vsel %vm148, %v97, 0
    %155 = vmatprep.subr.bf16.mxu0 0
    %156 = vmatpush1.bf16.msra.mxu0 0
    %157 = vmatprep.subr.bf16.mxu0 0
    %158 = vmatpush1.bf16.msra.mxu0 0
    %159 = vmatprep.subr.bf16.mxu0 0
    %160 = vmatpush1.bf16.msra.mxu0 0
    %161 = vmatprep.subr.bf16.mxu0 %v137
    %162 = vmatpush1.bf16.msra.mxu0 %v136
    %163 = vmatprep.subr.bf16.mxu0 %v135
    %164 = vmatpush1.bf16.msra.mxu0 %v134
    %165 = vmatprep.subr.bf16.mxu0 %v133
    %166 = vmatpush1.bf16.msra.mxu0 %v132
    %167 = vmatprep.subr.bf16.mxu0 %v131
    %168 = vmatpush1.bf16.msra.mxu0 %v130
    %169 = vmatprep.subr.bf16.mxu0 %v129
    %170 = vmatpush1.bf16.msra.mxu0 %v128
    %171 = vmatprep.subr.bf16.mxu0 0
    %172 = vmatpush2.bf16.msra.mxu0 0
    %173 = vmatprep.subr.bf16.mxu0 0
    %174 = vmatpush2.bf16.msra.mxu0 0
    %175 = vmatprep.subr.bf16.mxu0 0
    %176 = vmatpush2.bf16.msra.mxu0 0
    %177 = vmatprep.subr.bf16.mxu0 0
    %178 = vmatpush2.bf16.msra.mxu0 0
    %179 = vmatprep.subr.bf16.mxu0 0
    %180 = vmatpush2.bf16.msra.mxu0 0
    %181 = vmatprep.subr.bf16.mxu0 0
    %182 = vmatpush2.bf16.msra.mxu0 0
    %183 = vmatprep.subr.bf16.mxu0 0
    %184 = vmatpush2.bf16.msra.mxu0 0
    %185 = vmatprep.subr.bf16.mxu0 0
    %186 = vmatpush2.bf16.msra.mxu0 0
    %187 = vmatprep.mubr.bf16.mxu0 0
    %188 = vmatmul.mubr.bf16.gmra.mxu0 %v150
    %v189 = vpop.f32.mrf.mxu0
    %v190 = vadd.f32 0.0, %v189
    %v191 = vpop.f32.mrf.mxu0
    %v192 = vadd.f32 0.0, %v191
    %v193 = vpop.f32.mrf.mxu0
    %v194 = vadd.f32 0.0, %v193
    %v195 = vpop.f32.mrf.mxu0
    %v196 = vadd.f32 0.0, %v195
    %197 = vmatprep.mubr.bf16.mxu0 0
    %198 = vmatmul.mubr.bf16.gmra.mxu0 %v153
    %v199 = vpop.f32.mrf.mxu0
    %v200 = vadd.f32 0.0, %v199
    %v201 = vpop.f32.mrf.mxu0
    %v202 = vadd.f32 0.0, %v201
    %v203 = vpop.f32.mrf.mxu0
    %v204 = vadd.f32 0.0, %v203
    %v205 = vpop.f32.mrf.mxu0
    %v206 = vadd.f32 0.0, %v205
    %207 = vdwg.mxu0
    %v208 = vld [vmem:[#allocation7] sm:$0xff]
    %v209 = vld [vmem:[#allocation7 + $0x8] sm:$0xff]
    %v210 = vld [vmem:[#allocation7 + $0x10] sm:$0xff]
    %v211 = vld [vmem:[#allocation7 + $0x18] sm:$0xff]
    %v212 = vld [vmem:[#allocation7 + $0x20] sm:$0xff]
    %v213 = vld [vmem:[#allocation7 + $0x28] sm:$0xff]
    %v214 = vld [vmem:[#allocation7 + $0x30] sm:$0xff]
    %v215 = vld [vmem:[#allocation7 + $0x38] sm:$0xff]
    %v216 = vld [vmem:[#allocation7 + $0x40] sm:$0xff]
    %v217 = vld [vmem:[#allocation7 + $0x48] sm:$0xff]
    %v228 = vunpack.c.l.b16 %v208
    %v229 = vunpack.c.h.b16 %v208
    %v230 = vunpack.c.l.b16 %v209
    %v231 = vunpack.c.h.b16 %v209
    %v232 = vunpack.c.l.b16 %v210
    %v233 = vunpack.c.h.b16 %v210
    %v234 = vunpack.c.l.b16 %v211
    %v235 = vunpack.c.h.b16 %v211
    %v236 = vunpack.c.l.b16 %v212
    %v237 = vunpack.c.h.b16 %v212
    %v238 = vunpack.c.l.b16 %v213
    %v239 = vunpack.c.h.b16 %v213
    %v240 = vunpack.c.l.b16 %v214
    %v241 = vunpack.c.h.b16 %v214
    %v242 = vunpack.c.l.b16 %v215
    %v243 = vunpack.c.h.b16 %v215
    %v244 = vunpack.c.l.b16 %v216
    %v245 = vunpack.c.h.b16 %v216
    %v246 = vunpack.c.l.b16 %v217
    %v247 = vunpack.c.h.b16 %v217
    %v248 = vpack.c.b16 %v230, %v228
    %v249 = vpack.c.b16 %v231, %v229
    %v250 = vpack.c.b16 %v234, %v232
    %v251 = vpack.c.b16 %v235, %v233
    %v252 = vpack.c.b16 %v238, %v236
    %v253 = vpack.c.b16 %v239, %v237
    %v254 = vpack.c.b16 %v242, %v240
    %v255 = vpack.c.b16 %v243, %v241
    %v256 = vpack.c.b16 %v246, %v244
    %v257 = vpack.c.b16 %v247, %v245
    %268 = vmatprep.subr.bf16.mxu0 0
    %269 = vmatpush1.bf16.msra.mxu0 0
    %270 = vmatprep.subr.bf16.mxu0 0
    %271 = vmatpush1.bf16.msra.mxu0 0
    %272 = vmatprep.subr.bf16.mxu0 0
    %273 = vmatpush1.bf16.msra.mxu0 0
    %274 = vmatprep.subr.bf16.mxu0 %v257
    %275 = vmatpush1.bf16.msra.mxu0 %v256
    %276 = vmatprep.subr.bf16.mxu0 %v255
    %277 = vmatpush1.bf16.msra.mxu0 %v254
    %278 = vmatprep.subr.bf16.mxu0 %v253
    %279 = vmatpush1.bf16.msra.mxu0 %v252
    %280 = vmatprep.subr.bf16.mxu0 %v251
    %281 = vmatpush1.bf16.msra.mxu0 %v250
    %282 = vmatprep.subr.bf16.mxu0 %v249
    %283 = vmatpush1.bf16.msra.mxu0 %v248
    %284 = vmatprep.subr.bf16.mxu0 0
    %285 = vmatpush2.bf16.msra.mxu0 0
    %286 = vmatprep.subr.bf16.mxu0 0
    %287 = vmatpush2.bf16.msra.mxu0 0
    %288 = vmatprep.subr.bf16.mxu0 0
    %289 = vmatpush2.bf16.msra.mxu0 0
    %290 = vmatprep.subr.bf16.mxu0 0
    %291 = vmatpush2.bf16.msra.mxu0 0
    %292 = vmatprep.subr.bf16.mxu0 0
    %293 = vmatpush2.bf16.msra.mxu0 0
    %294 = vmatprep.subr.bf16.mxu0 0
    %295 = vmatpush2.bf16.msra.mxu0 0
    %296 = vmatprep.subr.bf16.mxu0 0
    %297 = vmatpush2.bf16.msra.mxu0 0
    %298 = vmatprep.subr.bf16.mxu0 0
    %299 = vmatpush2.bf16.msra.mxu0 0
    %300 = vmatprep.mubr.bf16.mxu0 0
    %301 = vmatmul.mubr.bf16.gmra.mxu0 %v150
    %v302 = vpop.f32.mrf.mxu0
    %v303 = vadd.f32 0.0, %v302
    %v304 = vpop.f32.mrf.mxu0
    %v305 = vadd.f32 0.0, %v304
    %v306 = vpop.f32.mrf.mxu0
    %v307 = vadd.f32 0.0, %v306
    %v308 = vpop.f32.mrf.mxu0
    %v309 = vadd.f32 0.0, %v308
    %310 = vmatprep.mubr.bf16.mxu0 0
    %311 = vmatmul.mubr.bf16.gmra.mxu0 %v153
    %v312 = vpop.f32.mrf.mxu0
    %v313 = vadd.f32 0.0, %v312
    %v314 = vpop.f32.mrf.mxu0
    %v315 = vadd.f32 0.0, %v314
    %v316 = vpop.f32.mrf.mxu0
    %v317 = vadd.f32 0.0, %v316
    %v318 = vpop.f32.mrf.mxu0
    %v319 = vadd.f32 0.0, %v318
    %320 = vdwg.mxu0
    %v321 = vsub.f32 0.0, %v303
    %v322 = vsub.f32 0.0, %v307
    %v323 = vsub.f32 0.0, %v313
    %v324 = vsub.f32 0.0, %v317
    %v325 = vsub.f32 0.0, %v305
    %v326 = vsub.f32 0.0, %v309
    %v327 = vsub.f32 0.0, %v315
    %v328 = vsub.f32 0.0, %v319
    %v329 = vmul.f32 %v192, 1.442695
    %v330 = vpow.pop %v329
    %v331 = vmul.f32 %v196, 1.442695
    %v332 = vpow.pop %v331
    %v333 = vmul.f32 %v202, 1.442695
    %v334 = vpow.pop %v333
    %v335 = vmul.f32 %v206, 1.442695
    %v336 = vpow.pop %v335
    %v337 = vand.u32 2147483647, %v325
    %vm338 = vcmp.le.f32.partialorder %v337, 0.7853982
    %vm339 = vcmp.lt.s32.totalorder %v325, 0
    %v340 = vand.u32 %v325, 2139095040
    %v341 = vshrl.u32 %v340, 23
    %v342 = vsub.s32 %v341, 127
    %v343 = vand.u32 2147483647, %v325
    %v344 = vand.u32 %v343, 8388607
    %v345 = vor.u32 %v344, 8388608
    %v346 = vsub.s32 0, %v345
    %v347 = vadd.s32 %v342, 1
    %vm348 = vcmp.gt.s32.totalorder %v347, 0
    %v349 = vsel %vm348, %v347, 0
    %v350 = vshrl.u32 %v349, 5
    %v351 = vand.u32 %v349, 31
    %v352 = vsub.s32 32, %v351
    %v353 = vshrl.u32 683565275, %v352
    %v354 = vshll.u32 683565275, %v351
    %v355 = vshrl.u32 2475754826, %v352
    %v356 = vor.u32 %v354, %v355
    %v357 = vshll.u32 2475754826, %v351
    %v358 = vshrl.u32 2131351028, %v352
    %v359 = vor.u32 %v357, %v358
    %v360 = vshll.u32 2131351028, %v351
    %v361 = vshrl.u32 2102212464, %v352
    %v362 = vor.u32 %v360, %v361
    %v363 = vshll.u32 2102212464, %v351
    %v364 = vshrl.u32 920167782, %v352
    %v365 = vor.u32 %v363, %v364
    %v366 = vshll.u32 920167782, %v351
    %v367 = vshrl.u32 1326507024, %v352
    %v368 = vor.u32 %v366, %v367
    %vm369 = vcmp.lt.s32.totalorder %v350, 1
    %vm370 = vcmp.lt.s32.totalorder %v350, 2
    %vm371 = vcmp.lt.s32.totalorder %v350, 3
    %vm372 = vcmp.lt.s32.totalorder %v350, 4
    %v373 = vsel %vm369, %v353, %v356
    %v374 = vsel %vm372, %v362, 2102212464
    %v375 = vsel %vm371, %v359, %v374
    %v376 = vsel %vm370, %v373, %v375
    %v377 = vsel %vm369, %v356, %v359
    %v378 = vsel %vm372, %v365, 920167782
    %v379 = vsel %vm371, %v362, %v378
    %v380 = vsel %vm370, %v377, %v379
    %v381 = vsel %vm369, %v359, %v362
    %v382 = vsel %vm372, %v368, 1326507024
    %v383 = vsel %vm371, %v365, %v382
    %v384 = vsel %vm370, %v381, %v383
    %v385 = vshll.u32 %v345, 8
    %v386 = vmul.u32.u64.compose %v385, %v384
    %v387 = vextract.low.u32 %v386
    %v388 = vextract.high.u32 %v386
    %v389 = vmul.u32.u64.compose %v385, %v380
    %v390 = vextract.low.u32 %v389
    %v391 = vextract.high.u32 %v389
    %v392 = vmul.u32 %v385, %v376
    %v393 = vadd.s32 %v388, %v390
    %vm394 = vc.u32 %v388, %v390
    %v395 = vadd.s32 %v391, 1
    %v396 = vsel %vm394, %v395, %v391
    %v397 = vadd.s32 %v392, %v396
    %v398 = vadd.s32 %v397, 536870912
    %v399 = vshrl.u32 %v398, 30
    %v400 = vshll.u32 %v399, 30
    %v401 = vsub.s32 %v397, %v400
    %vm402 = vcmp.lt.s32.totalorder %v401, 0
    %v403 = vsub.s32 0, %v401
    %v404 = vsel %vm402, %v403, %v401
    %v405 = vclz %v404
    %v406 = vsub.s32 %v405, 2
    %vm407 = vcmp.gt.s32.totalorder 0, %v406
    %v408 = vsel %vm407, 0, %v406
    %v409 = vsub.s32 32, %v408
    %v410 = vshll.u32 %v401, %v408
    %v411 = vshrl.u32 %v393, %v409
    %v412 = vor.u32 %v410, %v411
    %v413 = vsub.s32 4294967266, %v408
    %v414 = vadd.s32 %v413, 127
    %v415 = vshll.u32 %v414, 23
    %v416 = vor.u32 4788187, %v415
    %v417 = vand.u32 2147483647, %v416
    %v419 = vcvt.s32.f32 %v412
    %v420 = vmul.f32 %v419, %v417
    %v421 = vxor.u32 %v420, 2147483648
    %v422 = vsel %vm339, %v421, %v420
    %v423 = vsub.s32 4, %v399
    %v424 = vsel %vm339, %v423, %v399
    %v425 = vsel %vm338, %v325, %v422
    %v426 = vsel %vm338, 0, %v424
    %v427 = vcosq.f32.pop %v425
    %v428 = vsinq.f32.pop %v425
    %vm429 = vweird.f32 %v325
    %v430 = vand.u32 %v426, 3
    %vm431 = vcmp.lt.s32.totalorder %v430, 2
    %vm432 = vcmp.eq.s32.totalorder %v430, 0
    %v433 = vxor.u32 %v428, 2147483648
    %v434 = vsel %vm432, %v427, %v433
    %vm435 = vcmp.eq.s32.totalorder %v430, 2
    %v436 = vxor.u32 %v427, 2147483648
    %v437 = vsel %vm435, %v436, %v428
    %v438 = vsel %vm431, %v434, %v437
    %v439 = vsel %vm429, nan, %v438
    %v440 = vand.u32 2147483647, %v326
    %vm441 = vcmp.le.f32.partialorder %v440, 0.7853982
    %vm442 = vcmp.lt.s32.totalorder %v326, 0
    %v443 = vand.u32 %v326, 2139095040
    %v444 = vshrl.u32 %v443, 23
    %v445 = vsub.s32 %v444, 127
    %v446 = vand.u32 2147483647, %v326
    %v447 = vand.u32 %v446, 8388607
    %v448 = vor.u32 %v447, 8388608
    %v449 = vsub.s32 0, %v448
    %v450 = vadd.s32 %v445, 1
    %vm451 = vcmp.gt.s32.totalorder %v450, 0
    %v452 = vsel %vm451, %v450, 0
    %v453 = vshrl.u32 %v452, 5
    %v454 = vand.u32 %v452, 31
    %v455 = vsub.s32 32, %v454
    %v456 = vshrl.u32 683565275, %v455
    %v457 = vshll.u32 683565275, %v454
    %v458 = vshrl.u32 2475754826, %v455
    %v459 = vor.u32 %v457, %v458
    %v460 = vshll.u32 2475754826, %v454
    %v461 = vshrl.u32 2131351028, %v455
    %v462 = vor.u32 %v460, %v461
    %v463 = vshll.u32 2131351028, %v454
    %v464 = vshrl.u32 2102212464, %v455
    %v465 = vor.u32 %v463, %v464
    %v466 = vshll.u32 2102212464, %v454
    %v467 = vshrl.u32 920167782, %v455
    %v468 = vor.u32 %v466, %v467
    %v469 = vshll.u32 920167782, %v454
    %v470 = vshrl.u32 1326507024, %v455
    %v471 = vor.u32 %v469, %v470
    %vm472 = vcmp.lt.s32.totalorder %v453, 1
    %vm473 = vcmp.lt.s32.totalorder %v453, 2
    %vm474 = vcmp.lt.s32.totalorder %v453, 3
    %vm475 = vcmp.lt.s32.totalorder %v453, 4
    %v476 = vsel %vm472, %v456, %v459
    %v477 = vsel %vm475, %v465, 2102212464
    %v478 = vsel %vm474, %v462, %v477
    %v479 = vsel %vm473, %v476, %v478
    %v480 = vsel %vm472, %v459, %v462
    %v481 = vsel %vm475, %v468, 920167782
    %v482 = vsel %vm474, %v465, %v481
    %v483 = vsel %vm473, %v480, %v482
    %v484 = vsel %vm472, %v462, %v465
    %v485 = vsel %vm475, %v471, 1326507024
    %v486 = vsel %vm474, %v468, %v485
    %v487 = vsel %vm473, %v484, %v486
    %v488 = vshll.u32 %v448, 8
    %v489 = vmul.u32.u64.compose %v488, %v487
    %v490 = vextract.low.u32 %v489
    %v491 = vextract.high.u32 %v489
    %v492 = vmul.u32.u64.compose %v488, %v483
    %v493 = vextract.low.u32 %v492
    %v494 = vextract.high.u32 %v492
    %v495 = vmul.u32 %v488, %v479
    %v496 = vadd.s32 %v491, %v493
    %vm497 = vc.u32 %v491, %v493
    %v498 = vadd.s32 %v494, 1
    %v499 = vsel %vm497, %v498, %v494
    %v500 = vadd.s32 %v495, %v499
    %v501 = vadd.s32 %v500, 536870912
    %v502 = vshrl.u32 %v501, 30
    %v503 = vshll.u32 %v502, 30
    %v504 = vsub.s32 %v500, %v503
    %vm505 = vcmp.lt.s32.totalorder %v504, 0
    %v506 = vsub.s32 0, %v504
    %v507 = vsel %vm505, %v506, %v504
    %v508 = vclz %v507
    %v509 = vsub.s32 %v508, 2
    %vm510 = vcmp.gt.s32.totalorder 0, %v509
    %v511 = vsel %vm510, 0, %v509
    %v512 = vsub.s32 32, %v511
    %v513 = vshll.u32 %v504, %v511
    %v514 = vshrl.u32 %v496, %v512
    %v515 = vor.u32 %v513, %v514
    %v516 = vsub.s32 4294967266, %v511
    %v517 = vadd.s32 %v516, 127
    %v518 = vshll.u32 %v517, 23
    %v519 = vor.u32 4788187, %v518
    %v520 = vand.u32 2147483647, %v519
    %v522 = vcvt.s32.f32 %v515
    %v523 = vmul.f32 %v522, %v520
    %v524 = vxor.u32 %v523, 2147483648
    %v525 = vsel %vm442, %v524, %v523
    %v526 = vsub.s32 4, %v502
    %v527 = vsel %vm442, %v526, %v502
    %v528 = vsel %vm441, %v326, %v525
    %v529 = vsel %vm441, 0, %v527
    %v530 = vcosq.f32.pop %v528
    %v531 = vsinq.f32.pop %v528
    %vm532 = vweird.f32 %v326
    %v533 = vand.u32 %v529, 3
    %vm534 = vcmp.lt.s32.totalorder %v533, 2
    %vm535 = vcmp.eq.s32.totalorder %v533, 0
    %v536 = vxor.u32 %v531, 2147483648
    %v537 = vsel %vm535, %v530, %v536
    %vm538 = vcmp.eq.s32.totalorder %v533, 2
    %v539 = vxor.u32 %v530, 2147483648
    %v540 = vsel %vm538, %v539, %v531
    %v541 = vsel %vm534, %v537, %v540
    %v542 = vsel %vm532, nan, %v541
    %v543 = vand.u32 2147483647, %v327
    %vm544 = vcmp.le.f32.partialorder %v543, 0.7853982
    %vm545 = vcmp.lt.s32.totalorder %v327, 0
    %v546 = vand.u32 %v327, 2139095040
    %v547 = vshrl.u32 %v546, 23
    %v548 = vsub.s32 %v547, 127
    %v549 = vand.u32 2147483647, %v327
    %v550 = vand.u32 %v549, 8388607
    %v551 = vor.u32 %v550, 8388608
    %v552 = vsub.s32 0, %v551
    %v553 = vadd.s32 %v548, 1
    %vm554 = vcmp.gt.s32.totalorder %v553, 0
    %v555 = vsel %vm554, %v553, 0
    %v556 = vshrl.u32 %v555, 5
    %v557 = vand.u32 %v555, 31
    %v558 = vsub.s32 32, %v557
    %v559 = vshrl.u32 683565275, %v558
    %v560 = vshll.u32 683565275, %v557
    %v561 = vshrl.u32 2475754826, %v558
    %v562 = vor.u32 %v560, %v561
    %v563 = vshll.u32 2475754826, %v557
    %v564 = vshrl.u32 2131351028, %v558
    %v565 = vor.u32 %v563, %v564
    %v566 = vshll.u32 2131351028, %v557
    %v567 = vshrl.u32 2102212464, %v558
    %v568 = vor.u32 %v566, %v567
    %v569 = vshll.u32 2102212464, %v557
    %v570 = vshrl.u32 920167782, %v558
    %v571 = vor.u32 %v569, %v570
    %v572 = vshll.u32 920167782, %v557
    %v573 = vshrl.u32 1326507024, %v558
    %v574 = vor.u32 %v572, %v573
    %vm575 = vcmp.lt.s32.totalorder %v556, 1
    %vm576 = vcmp.lt.s32.totalorder %v556, 2
    %vm577 = vcmp.lt.s32.totalorder %v556, 3
    %vm578 = vcmp.lt.s32.totalorder %v556, 4
    %v579 = vsel %vm575, %v559, %v562
    %v580 = vsel %vm578, %v568, 2102212464
    %v581 = vsel %vm577, %v565, %v580
    %v582 = vsel %vm576, %v579, %v581
    %v583 = vsel %vm575, %v562, %v565
    %v584 = vsel %vm578, %v571, 920167782
    %v585 = vsel %vm577, %v568, %v584
    %v586 = vsel %vm576, %v583, %v585
    %v587 = vsel %vm575, %v565, %v568
    %v588 = vsel %vm578, %v574, 1326507024
    %v589 = vsel %vm577, %v571, %v588
    %v590 = vsel %vm576, %v587, %v589
    %v591 = vshll.u32 %v551, 8
    %v592 = vmul.u32.u64.compose %v591, %v590
    %v593 = vextract.low.u32 %v592
    %v594 = vextract.high.u32 %v592
    %v595 = vmul.u32.u64.compose %v591, %v586
    %v596 = vextract.low.u32 %v595
    %v597 = vextract.high.u32 %v595
    %v598 = vmul.u32 %v591, %v582
    %v599 = vadd.s32 %v594, %v596
    %vm600 = vc.u32 %v594, %v596
    %v601 = vadd.s32 %v597, 1
    %v602 = vsel %vm600, %v601, %v597
    %v603 = vadd.s32 %v598, %v602
    %v604 = vadd.s32 %v603, 536870912
    %v605 = vshrl.u32 %v604, 30
    %v606 = vshll.u32 %v605, 30
    %v607 = vsub.s32 %v603, %v606
    %vm608 = vcmp.lt.s32.totalorder %v607, 0
    %v609 = vsub.s32 0, %v607
    %v610 = vsel %vm608, %v609, %v607
    %v611 = vclz %v610
    %v612 = vsub.s32 %v611, 2
    %vm613 = vcmp.gt.s32.totalorder 0, %v612
    %v614 = vsel %vm613, 0, %v612
    %v615 = vsub.s32 32, %v614
    %v616 = vshll.u32 %v607, %v614
    %v617 = vshrl.u32 %v599, %v615
    %v618 = vor.u32 %v616, %v617
    %v619 = vsub.s32 4294967266, %v614
    %v620 = vadd.s32 %v619, 127
    %v621 = vshll.u32 %v620, 23
    %v622 = vor.u32 4788187, %v621
    %v623 = vand.u32 2147483647, %v622
    %v625 = vcvt.s32.f32 %v618
    %v626 = vmul.f32 %v625, %v623
    %v627 = vxor.u32 %v626, 2147483648
    %v628 = vsel %vm545, %v627, %v626
    %v629 = vsub.s32 4, %v605
    %v630 = vsel %vm545, %v629, %v605
    %v631 = vsel %vm544, %v327, %v628
    %v632 = vsel %vm544, 0, %v630
    %v633 = vcosq.f32.pop %v631
    %v634 = vsinq.f32.pop %v631
    %vm635 = vweird.f32 %v327
    %v636 = vand.u32 %v632, 3
    %vm637 = vcmp.lt.s32.totalorder %v636, 2
    %vm638 = vcmp.eq.s32.totalorder %v636, 0
    %v639 = vxor.u32 %v634, 2147483648
    %v640 = vsel %vm638, %v633, %v639
    %vm641 = vcmp.eq.s32.totalorder %v636, 2
    %v642 = vxor.u32 %v633, 2147483648
    %v643 = vsel %vm641, %v642, %v634
    %v644 = vsel %vm637, %v640, %v643
    %v645 = vsel %vm635, nan, %v644
    %v646 = vand.u32 2147483647, %v328
    %vm647 = vcmp.le.f32.partialorder %v646, 0.7853982
    %vm648 = vcmp.lt.s32.totalorder %v328, 0
    %v649 = vand.u32 %v328, 2139095040
    %v650 = vshrl.u32 %v649, 23
    %v651 = vsub.s32 %v650, 127
    %v652 = vand.u32 2147483647, %v328
    %v653 = vand.u32 %v652, 8388607
    %v654 = vor.u32 %v653, 8388608
    %v655 = vsub.s32 0, %v654
    %v656 = vadd.s32 %v651, 1
    %vm657 = vcmp.gt.s32.totalorder %v656, 0
    %v658 = vsel %vm657, %v656, 0
    %v659 = vshrl.u32 %v658, 5
    %v660 = vand.u32 %v658, 31
    %v661 = vsub.s32 32, %v660
    %v662 = vshrl.u32 683565275, %v661
    %v663 = vshll.u32 683565275, %v660
    %v664 = vshrl.u32 2475754826, %v661
    %v665 = vor.u32 %v663, %v664
    %v666 = vshll.u32 2475754826, %v660
    %v667 = vshrl.u32 2131351028, %v661
    %v668 = vor.u32 %v666, %v667
    %v669 = vshll.u32 2131351028, %v660
    %v670 = vshrl.u32 2102212464, %v661
    %v671 = vor.u32 %v669, %v670
    %v672 = vshll.u32 2102212464, %v660
    %v673 = vshrl.u32 920167782, %v661
    %v674 = vor.u32 %v672, %v673
    %v675 = vshll.u32 920167782, %v660
    %v676 = vshrl.u32 1326507024, %v661
    %v677 = vor.u32 %v675, %v676
    %vm678 = vcmp.lt.s32.totalorder %v659, 1
    %vm679 = vcmp.lt.s32.totalorder %v659, 2
    %vm680 = vcmp.lt.s32.totalorder %v659, 3
    %vm681 = vcmp.lt.s32.totalorder %v659, 4
    %v682 = vsel %vm678, %v662, %v665
    %v683 = vsel %vm681, %v671, 2102212464
    %v684 = vsel %vm680, %v668, %v683
    %v685 = vsel %vm679, %v682, %v684
    %v686 = vsel %vm678, %v665, %v668
    %v687 = vsel %vm681, %v674, 920167782
    %v688 = vsel %vm680, %v671, %v687
    %v689 = vsel %vm679, %v686, %v688
    %v690 = vsel %vm678, %v668, %v671
    %v691 = vsel %vm681, %v677, 1326507024
    %v692 = vsel %vm680, %v674, %v691
    %v693 = vsel %vm679, %v690, %v692
    %v694 = vshll.u32 %v654, 8
    %v695 = vmul.u32.u64.compose %v694, %v693
    %v696 = vextract.low.u32 %v695
    %v697 = vextract.high.u32 %v695
    %v698 = vmul.u32.u64.compose %v694, %v689
    %v699 = vextract.low.u32 %v698
    %v700 = vextract.high.u32 %v698
    %v701 = vmul.u32 %v694, %v685
    %v702 = vadd.s32 %v697, %v699
    %vm703 = vc.u32 %v697, %v699
    %v704 = vadd.s32 %v700, 1
    %v705 = vsel %vm703, %v704, %v700
    %v706 = vadd.s32 %v701, %v705
    %v707 = vadd.s32 %v706, 536870912
    %v708 = vshrl.u32 %v707, 30
    %v709 = vshll.u32 %v708, 30
    %v710 = vsub.s32 %v706, %v709
    %vm711 = vcmp.lt.s32.totalorder %v710, 0
    %v712 = vsub.s32 0, %v710
    %v713 = vsel %vm711, %v712, %v710
    %v714 = vclz %v713
    %v715 = vsub.s32 %v714, 2
    %vm716 = vcmp.gt.s32.totalorder 0, %v715
    %v717 = vsel %vm716, 0, %v715
    %v718 = vsub.s32 32, %v717
    %v719 = vshll.u32 %v710, %v717
    %v720 = vshrl.u32 %v702, %v718
    %v721 = vor.u32 %v719, %v720
    %v722 = vsub.s32 4294967266, %v717
    %v723 = vadd.s32 %v722, 127
    %v724 = vshll.u32 %v723, 23
    %v725 = vor.u32 4788187, %v724
    %v726 = vand.u32 2147483647, %v725
    %v728 = vcvt.s32.f32 %v721
    %v729 = vmul.f32 %v728, %v726
    %v730 = vxor.u32 %v729, 2147483648
    %v731 = vsel %vm648, %v730, %v729
    %v732 = vsub.s32 4, %v708
    %v733 = vsel %vm648, %v732, %v708
    %v734 = vsel %vm647, %v328, %v731
    %v735 = vsel %vm647, 0, %v733
    %v736 = vcosq.f32.pop %v734
    %v737 = vsinq.f32.pop %v734
    %vm738 = vweird.f32 %v328
    %v739 = vand.u32 %v735, 3
    %vm740 = vcmp.lt.s32.totalorder %v739, 2
    %vm741 = vcmp.eq.s32.totalorder %v739, 0
    %v742 = vxor.u32 %v737, 2147483648
    %v743 = vsel %vm741, %v736, %v742
    %vm744 = vcmp.eq.s32.totalorder %v739, 2
    %v745 = vxor.u32 %v736, 2147483648
    %v746 = vsel %vm744, %v745, %v737
    %v747 = vsel %vm740, %v743, %v746
    %v748 = vsel %vm738, nan, %v747
    %v749 = vmul.f32 %v330, %v439
    %v750 = vmul.f32 %v332, %v542
    %v751 = vmul.f32 %v334, %v645
    %v752 = vmul.f32 %v336, %v748
    %v753 = vand.u32 2147483647, %v325
    %vm754 = vcmp.le.f32.partialorder %v753, 0.7853982
    %vm755 = vcmp.lt.s32.totalorder %v325, 0
    %v756 = vand.u32 %v325, 2139095040
    %v757 = vshrl.u32 %v756, 23
    %v758 = vsub.s32 %v757, 127
    %v759 = vand.u32 2147483647, %v325
    %v760 = vand.u32 %v759, 8388607
    %v761 = vor.u32 %v760, 8388608
    %v762 = vsub.s32 0, %v761
    %v763 = vadd.s32 %v758, 1
    %vm764 = vcmp.gt.s32.totalorder %v763, 0
    %v765 = vsel %vm764, %v763, 0
    %v766 = vshrl.u32 %v765, 5
    %v767 = vand.u32 %v765, 31
    %v768 = vsub.s32 32, %v767
    %v769 = vshrl.u32 683565275, %v768
    %v770 = vshll.u32 683565275, %v767
    %v771 = vshrl.u32 2475754826, %v768
    %v772 = vor.u32 %v770, %v771
    %v773 = vshll.u32 2475754826, %v767
    %v774 = vshrl.u32 2131351028, %v768
    %v775 = vor.u32 %v773, %v774
    %v776 = vshll.u32 2131351028, %v767
    %v777 = vshrl.u32 2102212464, %v768
    %v778 = vor.u32 %v776, %v777
    %v779 = vshll.u32 2102212464, %v767
    %v780 = vshrl.u32 920167782, %v768
    %v781 = vor.u32 %v779, %v780
    %v782 = vshll.u32 920167782, %v767
    %v783 = vshrl.u32 1326507024, %v768
    %v784 = vor.u32 %v782, %v783
    %vm785 = vcmp.lt.s32.totalorder %v766, 1
    %vm786 = vcmp.lt.s32.totalorder %v766, 2
    %vm787 = vcmp.lt.s32.totalorder %v766, 3
    %vm788 = vcmp.lt.s32.totalorder %v766, 4
    %v789 = vsel %vm785, %v769, %v772
    %v790 = vsel %vm788, %v778, 2102212464
    %v791 = vsel %vm787, %v775, %v790
    %v792 = vsel %vm786, %v789, %v791
    %v793 = vsel %vm785, %v772, %v775
    %v794 = vsel %vm788, %v781, 920167782
    %v795 = vsel %vm787, %v778, %v794
    %v796 = vsel %vm786, %v793, %v795
    %v797 = vsel %vm785, %v775, %v778
    %v798 = vsel %vm788, %v784, 1326507024
    %v799 = vsel %vm787, %v781, %v798
    %v800 = vsel %vm786, %v797, %v799
    %v801 = vshll.u32 %v761, 8
    %v802 = vmul.u32.u64.compose %v801, %v800
    %v803 = vextract.low.u32 %v802
    %v804 = vextract.high.u32 %v802
    %v805 = vmul.u32.u64.compose %v801, %v796
    %v806 = vextract.low.u32 %v805
    %v807 = vextract.high.u32 %v805
    %v808 = vmul.u32 %v801, %v792
    %v809 = vadd.s32 %v804, %v806
    %vm810 = vc.u32 %v804, %v806
    %v811 = vadd.s32 %v807, 1
    %v812 = vsel %vm810, %v811, %v807
    %v813 = vadd.s32 %v808, %v812
    %v814 = vadd.s32 %v813, 536870912
    %v815 = vshrl.u32 %v814, 30
    %v816 = vshll.u32 %v815, 30
    %v817 = vsub.s32 %v813, %v816
    %vm818 = vcmp.lt.s32.totalorder %v817, 0
    %v819 = vsub.s32 0, %v817
    %v820 = vsel %vm818, %v819, %v817
    %v821 = vclz %v820
    %v822 = vsub.s32 %v821, 2
    %vm823 = vcmp.gt.s32.totalorder 0, %v822
    %v824 = vsel %vm823, 0, %v822
    %v825 = vsub.s32 32, %v824
    %v826 = vshll.u32 %v817, %v824
    %v827 = vshrl.u32 %v809, %v825
    %v828 = vor.u32 %v826, %v827
    %v829 = vsub.s32 4294967266, %v824
    %v830 = vadd.s32 %v829, 127
    %v831 = vshll.u32 %v830, 23
    %v832 = vor.u32 4788187, %v831
    %v833 = vand.u32 2147483647, %v832
    %v835 = vcvt.s32.f32 %v828
    %v836 = vmul.f32 %v835, %v833
    %v837 = vxor.u32 %v836, 2147483648
    %v838 = vsel %vm755, %v837, %v836
    %v839 = vsub.s32 4, %v815
    %v840 = vsel %vm755, %v839, %v815
    %v841 = vsel %vm754, %v325, %v838
    %v842 = vsel %vm754, 0, %v840
    %v843 = vcosq.f32.pop %v841
    %v844 = vsinq.f32.pop %v841
    %vm845 = vweird.f32 %v325
    %v846 = vadd.s32 %v842, 3
    %v847 = vand.u32 %v846, 3
    %vm848 = vcmp.lt.s32.totalorder %v847, 2
    %vm849 = vcmp.eq.s32.totalorder %v847, 0
    %v850 = vxor.u32 %v844, 2147483648
    %v851 = vsel %vm849, %v843, %v850
    %vm852 = vcmp.eq.s32.totalorder %v847, 2
    %v853 = vxor.u32 %v843, 2147483648
    %v854 = vsel %vm852, %v853, %v844
    %v855 = vsel %vm848, %v851, %v854
    %v856 = vsel %vm845, nan, %v855
    %v857 = vand.u32 2147483647, %v326
    %vm858 = vcmp.le.f32.partialorder %v857, 0.7853982
    %vm859 = vcmp.lt.s32.totalorder %v326, 0
    %v860 = vand.u32 %v326, 2139095040
    %v861 = vshrl.u32 %v860, 23
    %v862 = vsub.s32 %v861, 127
    %v863 = vand.u32 2147483647, %v326
    %v864 = vand.u32 %v863, 8388607
    %v865 = vor.u32 %v864, 8388608
    %v866 = vsub.s32 0, %v865
    %v867 = vadd.s32 %v862, 1
    %vm868 = vcmp.gt.s32.totalorder %v867, 0
    %v869 = vsel %vm868, %v867, 0
    %v870 = vshrl.u32 %v869, 5
    %v871 = vand.u32 %v869, 31
    %v872 = vsub.s32 32, %v871
    %v873 = vshrl.u32 683565275, %v872
    %v874 = vshll.u32 683565275, %v871
    %v875 = vshrl.u32 2475754826, %v872
    %v876 = vor.u32 %v874, %v875
    %v877 = vshll.u32 2475754826, %v871
    %v878 = vshrl.u32 2131351028, %v872
    %v879 = vor.u32 %v877, %v878
    %v880 = vshll.u32 2131351028, %v871
    %v881 = vshrl.u32 2102212464, %v872
    %v882 = vor.u32 %v880, %v881
    %v883 = vshll.u32 2102212464, %v871
    %v884 = vshrl.u32 920167782, %v872
    %v885 = vor.u32 %v883, %v884
    %v886 = vshll.u32 920167782, %v871
    %v887 = vshrl.u32 1326507024, %v872
    %v888 = vor.u32 %v886, %v887
    %vm889 = vcmp.lt.s32.totalorder %v870, 1
    %vm890 = vcmp.lt.s32.totalorder %v870, 2
    %vm891 = vcmp.lt.s32.totalorder %v870, 3
    %vm892 = vcmp.lt.s32.totalorder %v870, 4
    %v893 = vsel %vm889, %v873, %v876
    %v894 = vsel %vm892, %v882, 2102212464
    %v895 = vsel %vm891, %v879, %v894
    %v896 = vsel %vm890, %v893, %v895
    %v897 = vsel %vm889, %v876, %v879
    %v898 = vsel %vm892, %v885, 920167782
    %v899 = vsel %vm891, %v882, %v898
    %v900 = vsel %vm890, %v897, %v899
    %v901 = vsel %vm889, %v879, %v882
    %v902 = vsel %vm892, %v888, 1326507024
    %v903 = vsel %vm891, %v885, %v902
    %v904 = vsel %vm890, %v901, %v903
    %v905 = vshll.u32 %v865, 8
    %v906 = vmul.u32.u64.compose %v905, %v904
    %v907 = vextract.low.u32 %v906
    %v908 = vextract.high.u32 %v906
    %v909 = vmul.u32.u64.compose %v905, %v900
    %v910 = vextract.low.u32 %v909
    %v911 = vextract.high.u32 %v909
    %v912 = vmul.u32 %v905, %v896
    %v913 = vadd.s32 %v908, %v910
    %vm914 = vc.u32 %v908, %v910
    %v915 = vadd.s32 %v911, 1
    %v916 = vsel %vm914, %v915, %v911
    %v917 = vadd.s32 %v912, %v916
    %v918 = vadd.s32 %v917, 536870912
    %v919 = vshrl.u32 %v918, 30
    %v920 = vshll.u32 %v919, 30
    %v921 = vsub.s32 %v917, %v920
    %vm922 = vcmp.lt.s32.totalorder %v921, 0
    %v923 = vsub.s32 0, %v921
    %v924 = vsel %vm922, %v923, %v921
    %v925 = vclz %v924
    %v926 = vsub.s32 %v925, 2
    %vm927 = vcmp.gt.s32.totalorder 0, %v926
    %v928 = vsel %vm927, 0, %v926
    %v929 = vsub.s32 32, %v928
    %v930 = vshll.u32 %v921, %v928
    %v931 = vshrl.u32 %v913, %v929
    %v932 = vor.u32 %v930, %v931
    %v933 = vsub.s32 4294967266, %v928
    %v934 = vadd.s32 %v933, 127
    %v935 = vshll.u32 %v934, 23
    %v936 = vor.u32 4788187, %v935
    %v937 = vand.u32 2147483647, %v936
    %v939 = vcvt.s32.f32 %v932
    %v940 = vmul.f32 %v939, %v937
    %v941 = vxor.u32 %v940, 2147483648
    %v942 = vsel %vm859, %v941, %v940
    %v943 = vsub.s32 4, %v919
    %v944 = vsel %vm859, %v943, %v919
    %v945 = vsel %vm858, %v326, %v942
    %v946 = vsel %vm858, 0, %v944
    %v947 = vcosq.f32.pop %v945
    %v948 = vsinq.f32.pop %v945
    %vm949 = vweird.f32 %v326
    %v950 = vadd.s32 %v946, 3
    %v951 = vand.u32 %v950, 3
    %vm952 = vcmp.lt.s32.totalorder %v951, 2
    %vm953 = vcmp.eq.s32.totalorder %v951, 0
    %v954 = vxor.u32 %v948, 2147483648
    %v955 = vsel %vm953, %v947, %v954
    %vm956 = vcmp.eq.s32.totalorder %v951, 2
    %v957 = vxor.u32 %v947, 2147483648
    %v958 = vsel %vm956, %v957, %v948
    %v959 = vsel %vm952, %v955, %v958
    %v960 = vsel %vm949, nan, %v959
    %v961 = vand.u32 2147483647, %v327
    %vm962 = vcmp.le.f32.partialorder %v961, 0.7853982
    %vm963 = vcmp.lt.s32.totalorder %v327, 0
    %v964 = vand.u32 %v327, 2139095040
    %v965 = vshrl.u32 %v964, 23
    %v966 = vsub.s32 %v965, 127
    %v967 = vand.u32 2147483647, %v327
    %v968 = vand.u32 %v967, 8388607
    %v969 = vor.u32 %v968, 8388608
    %v970 = vsub.s32 0, %v969
    %v971 = vadd.s32 %v966, 1
    %vm972 = vcmp.gt.s32.totalorder %v971, 0
    %v973 = vsel %vm972, %v971, 0
    %v974 = vshrl.u32 %v973, 5
    %v975 = vand.u32 %v973, 31
    %v976 = vsub.s32 32, %v975
    %v977 = vshrl.u32 683565275, %v976
    %v978 = vshll.u32 683565275, %v975
    %v979 = vshrl.u32 2475754826, %v976
    %v980 = vor.u32 %v978, %v979
    %v981 = vshll.u32 2475754826, %v975
    %v982 = vshrl.u32 2131351028, %v976
    %v983 = vor.u32 %v981, %v982
    %v984 = vshll.u32 2131351028, %v975
    %v985 = vshrl.u32 2102212464, %v976
    %v986 = vor.u32 %v984, %v985
    %v987 = vshll.u32 2102212464, %v975
    %v988 = vshrl.u32 920167782, %v976
    %v989 = vor.u32 %v987, %v988
    %v990 = vshll.u32 920167782, %v975
    %v991 = vshrl.u32 1326507024, %v976
    %v992 = vor.u32 %v990, %v991
    %vm993 = vcmp.lt.s32.totalorder %v974, 1
    %vm994 = vcmp.lt.s32.totalorder %v974, 2
    %vm995 = vcmp.lt.s32.totalorder %v974, 3
    %vm996 = vcmp.lt.s32.totalorder %v974, 4
    %v997 = vsel %vm993, %v977, %v980
    %v998 = vsel %vm996, %v986, 2102212464
    %v999 = vsel %vm995, %v983, %v998
    %v1000 = vsel %vm994, %v997, %v999
    %v1001 = vsel %vm993, %v980, %v983
    %v1002 = vsel %vm996, %v989, 920167782
    %v1003 = vsel %vm995, %v986, %v1002
    %v1004 = vsel %vm994, %v1001, %v1003
    %v1005 = vsel %vm993, %v983, %v986
    %v1006 = vsel %vm996, %v992, 1326507024
    %v1007 = vsel %vm995, %v989, %v1006
    %v1008 = vsel %vm994, %v1005, %v1007
    %v1009 = vshll.u32 %v969, 8
    %v1010 = vmul.u32.u64.compose %v1009, %v1008
    %v1011 = vextract.low.u32 %v1010
    %v1012 = vextract.high.u32 %v1010
    %v1013 = vmul.u32.u64.compose %v1009, %v1004
    %v1014 = vextract.low.u32 %v1013
    %v1015 = vextract.high.u32 %v1013
    %v1016 = vmul.u32 %v1009, %v1000
    %v1017 = vadd.s32 %v1012, %v1014
    %vm1018 = vc.u32 %v1012, %v1014
    %v1019 = vadd.s32 %v1015, 1
    %v1020 = vsel %vm1018, %v1019, %v1015
    %v1021 = vadd.s32 %v1016, %v1020
    %v1022 = vadd.s32 %v1021, 536870912
    %v1023 = vshrl.u32 %v1022, 30
    %v1024 = vshll.u32 %v1023, 30
    %v1025 = vsub.s32 %v1021, %v1024
    %vm1026 = vcmp.lt.s32.totalorder %v1025, 0
    %v1027 = vsub.s32 0, %v1025
    %v1028 = vsel %vm1026, %v1027, %v1025
    %v1029 = vclz %v1028
    %v1030 = vsub.s32 %v1029, 2
    %vm1031 = vcmp.gt.s32.totalorder 0, %v1030
    %v1032 = vsel %vm1031, 0, %v1030
    %v1033 = vsub.s32 32, %v1032
    %v1034 = vshll.u32 %v1025, %v1032
    %v1035 = vshrl.u32 %v1017, %v1033
    %v1036 = vor.u32 %v1034, %v1035
    %v1037 = vsub.s32 4294967266, %v1032
    %v1038 = vadd.s32 %v1037, 127
    %v1039 = vshll.u32 %v1038, 23
    %v1040 = vor.u32 4788187, %v1039
    %v1041 = vand.u32 2147483647, %v1040
    %v1043 = vcvt.s32.f32 %v1036
    %v1044 = vmul.f32 %v1043, %v1041
    %v1045 = vxor.u32 %v1044, 2147483648
    %v1046 = vsel %vm963, %v1045, %v1044
    %v1047 = vsub.s32 4, %v1023
    %v1048 = vsel %vm963, %v1047, %v1023
    %v1049 = vsel %vm962, %v327, %v1046
    %v1050 = vsel %vm962, 0, %v1048
    %v1051 = vcosq.f32.pop %v1049
    %v1052 = vsinq.f32.pop %v1049
    %vm1053 = vweird.f32 %v327
    %v1054 = vadd.s32 %v1050, 3
    %v1055 = vand.u32 %v1054, 3
    %vm1056 = vcmp.lt.s32.totalorder %v1055, 2
    %vm1057 = vcmp.eq.s32.totalorder %v1055, 0
    %v1058 = vxor.u32 %v1052, 2147483648
    %v1059 = vsel %vm1057, %v1051, %v1058
    %vm1060 = vcmp.eq.s32.totalorder %v1055, 2
    %v1061 = vxor.u32 %v1051, 2147483648
    %v1062 = vsel %vm1060, %v1061, %v1052
    %v1063 = vsel %vm1056, %v1059, %v1062
    %v1064 = vsel %vm1053, nan, %v1063
    %v1065 = vand.u32 2147483647, %v328
    %vm1066 = vcmp.le.f32.partialorder %v1065, 0.7853982
    %vm1067 = vcmp.lt.s32.totalorder %v328, 0
    %v1068 = vand.u32 %v328, 2139095040
    %v1069 = vshrl.u32 %v1068, 23
    %v1070 = vsub.s32 %v1069, 127
    %v1071 = vand.u32 2147483647, %v328
    %v1072 = vand.u32 %v1071, 8388607
    %v1073 = vor.u32 %v1072, 8388608
    %v1074 = vsub.s32 0, %v1073
    %v1075 = vadd.s32 %v1070, 1
    %vm1076 = vcmp.gt.s32.totalorder %v1075, 0
    %v1077 = vsel %vm1076, %v1075, 0
    %v1078 = vshrl.u32 %v1077, 5
    %v1079 = vand.u32 %v1077, 31
    %v1080 = vsub.s32 32, %v1079
    %v1081 = vshrl.u32 683565275, %v1080
    %v1082 = vshll.u32 683565275, %v1079
    %v1083 = vshrl.u32 2475754826, %v1080
    %v1084 = vor.u32 %v1082, %v1083
    %v1085 = vshll.u32 2475754826, %v1079
    %v1086 = vshrl.u32 2131351028, %v1080
    %v1087 = vor.u32 %v1085, %v1086
    %v1088 = vshll.u32 2131351028, %v1079
    %v1089 = vshrl.u32 2102212464, %v1080
    %v1090 = vor.u32 %v1088, %v1089
    %v1091 = vshll.u32 2102212464, %v1079
    %v1092 = vshrl.u32 920167782, %v1080
    %v1093 = vor.u32 %v1091, %v1092
    %v1094 = vshll.u32 920167782, %v1079
    %v1095 = vshrl.u32 1326507024, %v1080
    %v1096 = vor.u32 %v1094, %v1095
    %vm1097 = vcmp.lt.s32.totalorder %v1078, 1
    %vm1098 = vcmp.lt.s32.totalorder %v1078, 2
    %vm1099 = vcmp.lt.s32.totalorder %v1078, 3
    %vm1100 = vcmp.lt.s32.totalorder %v1078, 4
    %v1101 = vsel %vm1097, %v1081, %v1084
    %v1102 = vsel %vm1100, %v1090, 2102212464
    %v1103 = vsel %vm1099, %v1087, %v1102
    %v1104 = vsel %vm1098, %v1101, %v1103
    %v1105 = vsel %vm1097, %v1084, %v1087
    %v1106 = vsel %vm1100, %v1093, 920167782
    %v1107 = vsel %vm1099, %v1090, %v1106
    %v1108 = vsel %vm1098, %v1105, %v1107
    %v1109 = vsel %vm1097, %v1087, %v1090
    %v1110 = vsel %vm1100, %v1096, 1326507024
    %v1111 = vsel %vm1099, %v1093, %v1110
    %v1112 = vsel %vm1098, %v1109, %v1111
    %v1113 = vshll.u32 %v1073, 8
    %v1114 = vmul.u32.u64.compose %v1113, %v1112
    %v1115 = vextract.low.u32 %v1114
    %v1116 = vextract.high.u32 %v1114
    %v1117 = vmul.u32.u64.compose %v1113, %v1108
    %v1118 = vextract.low.u32 %v1117
    %v1119 = vextract.high.u32 %v1117
    %v1120 = vmul.u32 %v1113, %v1104
    %v1121 = vadd.s32 %v1116, %v1118
    %vm1122 = vc.u32 %v1116, %v1118
    %v1123 = vadd.s32 %v1119, 1
    %v1124 = vsel %vm1122, %v1123, %v1119
    %v1125 = vadd.s32 %v1120, %v1124
    %v1126 = vadd.s32 %v1125, 536870912
    %v1127 = vshrl.u32 %v1126, 30
    %v1128 = vshll.u32 %v1127, 30
    %v1129 = vsub.s32 %v1125, %v1128
    %vm1130 = vcmp.lt.s32.totalorder %v1129, 0
    %v1131 = vsub.s32 0, %v1129
    %v1132 = vsel %vm1130, %v1131, %v1129
    %v1133 = vclz %v1132
    %v1134 = vsub.s32 %v1133, 2
    %vm1135 = vcmp.gt.s32.totalorder 0, %v1134
    %v1136 = vsel %vm1135, 0, %v1134
    %v1137 = vsub.s32 32, %v1136
    %v1138 = vshll.u32 %v1129, %v1136
    %v1139 = vshrl.u32 %v1121, %v1137
    %v1140 = vor.u32 %v1138, %v1139
    %v1141 = vsub.s32 4294967266, %v1136
    %v1142 = vadd.s32 %v1141, 127
    %v1143 = vshll.u32 %v1142, 23
    %v1144 = vor.u32 4788187, %v1143
    %v1145 = vand.u32 2147483647, %v1144
    %v1147 = vcvt.s32.f32 %v1140
    %v1148 = vmul.f32 %v1147, %v1145
    %v1149 = vxor.u32 %v1148, 2147483648
    %v1150 = vsel %vm1067, %v1149, %v1148
    %v1151 = vsub.s32 4, %v1127
    %v1152 = vsel %vm1067, %v1151, %v1127
    %v1153 = vsel %vm1066, %v328, %v1150
    %v1154 = vsel %vm1066, 0, %v1152
    %v1155 = vcosq.f32.pop %v1153
    %v1156 = vsinq.f32.pop %v1153
    %vm1157 = vweird.f32 %v328
    %v1158 = vadd.s32 %v1154, 3
    %v1159 = vand.u32 %v1158, 3
    %vm1160 = vcmp.lt.s32.totalorder %v1159, 2
    %vm1161 = vcmp.eq.s32.totalorder %v1159, 0
    %v1162 = vxor.u32 %v1156, 2147483648
    %v1163 = vsel %vm1161, %v1155, %v1162
    %vm1164 = vcmp.eq.s32.totalorder %v1159, 2
    %v1165 = vxor.u32 %v1155, 2147483648
    %v1166 = vsel %vm1164, %v1165, %v1156
    %v1167 = vsel %vm1160, %v1163, %v1166
    %v1168 = vsel %vm1157, nan, %v1167
    %v1169 = vmul.f32 %v330, %v856
    %v1170 = vmul.f32 %v332, %v960
    %v1171 = vmul.f32 %v334, %v1064
    %v1172 = vmul.f32 %v336, %v1168
    %v1173 = vmul.f32 %v749, %v190
    %v1174 = vmul.f32 %v750, %v194
    %v1175 = vmul.f32 %v751, %v200
    %v1176 = vmul.f32 %v752, %v204
    %v1177 = vmul.f32 %v1169, %v321
    %v1178 = vmul.f32 %v1170, %v322
    %v1179 = vmul.f32 %v1171, %v323
    %v1180 = vmul.f32 %v1172, %v324
    %v1181 = vsub.f32 %v1173, %v1177
    %v1182 = vsub.f32 %v1174, %v1178
    %v1183 = vsub.f32 %v1175, %v1179
    %v1184 = vsub.f32 %v1176, %v1180
    %v1185 = vmul.f32 %v749, %v321
    %v1186 = vmul.f32 %v750, %v322
    %v1187 = vmul.f32 %v751, %v323
    %v1188 = vmul.f32 %v752, %v324
    %v1189 = vmul.f32 %v1169, %v190
    %v1190 = vmul.f32 %v1170, %v194
    %v1191 = vmul.f32 %v1171, %v200
    %v1192 = vmul.f32 %v1172, %v204
    %v1193 = vadd.f32 %v1185, %v1189
    %v1194 = vadd.f32 %v1186, %v1190
    %v1195 = vadd.f32 %v1187, %v1191
    %v1196 = vadd.f32 %v1188, %v1192
    %v1197 = vpack.c.bf16 %v1182, %v1181
    %v1198 = vpack.c.bf16 %v1194, %v1193
    %v1199 = vpack.c.bf16 %v1184, %v1183
    %v1200 = vpack.c.bf16 %v1196, %v1195
    %v1201 = vld [vmem:[#allocation8] sm:$0xf]
    %v1202 = vld [vmem:[#allocation8 + $0x4] sm:$0xf]
    %v1203 = vld [vmem:[#allocation8 + $0x8] sm:$0xf]
    %v1204 = vld [vmem:[#allocation8 + $0xc] sm:$0xf]
    %v1205 = vld [vmem:[#allocation8 + $0x10] sm:$0xf]
    %v1206 = vld [vmem:[#allocation8 + $0x14] sm:$0xf]
    %v1207 = vld [vmem:[#allocation8 + $0x18] sm:$0xf]
    %v1208 = vld [vmem:[#allocation8 + $0x1c] sm:$0xf]
    %v1209 = vld [vmem:[#allocation8 + $0x20] sm:$0xf]
    %v1210 = vld [vmem:[#allocation8 + $0x24] sm:$0xf]
    %v1211 = vld [vmem:[#allocation8 + $0x28] sm:$0xf]
    %v1212 = vld [vmem:[#allocation8 + $0x2c] sm:$0xf]
    %v1213 = vld [vmem:[#allocation8 + $0x30] sm:$0xf]
    %v1214 = vld [vmem:[#allocation8 + $0x34] sm:$0xf]
    %v1215 = vld [vmem:[#allocation8 + $0x38] sm:$0xf]
    %v1216 = vld [vmem:[#allocation8 + $0x3c] sm:$0xf]
    %v1217 = vld [vmem:[#allocation8 + $0x40] sm:$0xf]
    %v1218 = vld [vmem:[#allocation8 + $0x44] sm:$0xf]
    %v1219 = vld [vmem:[#allocation8 + $0x48] sm:$0xf]
    %v1220 = vld [vmem:[#allocation8 + $0x4c] sm:$0xf]
    %v1221 = vld [vmem:[#allocation8 + $0x50] sm:$0xf]
    %v1222 = vld [vmem:[#allocation8 + $0x54] sm:$0xf]
    %v1223 = vld [vmem:[#allocation8 + $0x58] sm:$0xf]
    %v1224 = vld [vmem:[#allocation8 + $0x5c] sm:$0xf]
    %v1225 = vld [vmem:[#allocation8 + $0x60] sm:$0xf]
    %v1226 = vld [vmem:[#allocation8 + $0x64] sm:$0xf]
    %v1227 = vld [vmem:[#allocation8 + $0x68] sm:$0xf]
    %v1228 = vld [vmem:[#allocation8 + $0x6c] sm:$0xf]
    %v1229 = vld [vmem:[#allocation8 + $0x70] sm:$0xf]
    %v1230 = vld [vmem:[#allocation8 + $0x74] sm:$0xf]
    %v1231 = vld [vmem:[#allocation8 + $0x78] sm:$0xf]
    %v1232 = vld [vmem:[#allocation8 + $0x7c] sm:$0xf]
    %v1265 = vunpack.c.l.b16 %v1201
    %v1266 = vunpack.c.l.b16 %v1202
    %v1267 = vunpack.c.l.b16 %v1203
    %v1268 = vunpack.c.l.b16 %v1204
    %v1269 = vunpack.c.l.b16 %v1205
    %v1270 = vunpack.c.l.b16 %v1206
    %v1271 = vunpack.c.l.b16 %v1207
    %v1272 = vunpack.c.l.b16 %v1208
    %v1273 = vunpack.c.l.b16 %v1209
    %v1274 = vunpack.c.l.b16 %v1210
    %v1275 = vunpack.c.l.b16 %v1211
    %v1276 = vunpack.c.l.b16 %v1212
    %v1277 = vunpack.c.l.b16 %v1213
    %v1278 = vunpack.c.l.b16 %v1214
    %v1279 = vunpack.c.l.b16 %v1215
    %v1280 = vunpack.c.l.b16 %v1216
    %v1281 = vunpack.c.l.b16 %v1217
    %v1282 = vunpack.c.l.b16 %v1218
    %v1283 = vunpack.c.l.b16 %v1219
    %v1284 = vunpack.c.l.b16 %v1220
    %v1285 = vunpack.c.l.b16 %v1221
    %v1286 = vunpack.c.l.b16 %v1222
    %v1287 = vunpack.c.l.b16 %v1223
    %v1288 = vunpack.c.l.b16 %v1224
    %v1289 = vunpack.c.l.b16 %v1225
    %v1290 = vunpack.c.l.b16 %v1226
    %v1291 = vunpack.c.l.b16 %v1227
    %v1292 = vunpack.c.l.b16 %v1228
    %v1293 = vunpack.c.l.b16 %v1229
    %v1294 = vunpack.c.l.b16 %v1230
    %v1295 = vunpack.c.l.b16 %v1231
    %v1296 = vunpack.c.l.b16 %v1232
    %v1297 = vpack.c.b16 %v1266, %v1265
    %v1298 = vpack.c.b16 %v1268, %v1267
    %v1299 = vpack.c.b16 %v1270, %v1269
    %v1300 = vpack.c.b16 %v1272, %v1271
    %v1301 = vpack.c.b16 %v1274, %v1273
    %v1302 = vpack.c.b16 %v1276, %v1275
    %v1303 = vpack.c.b16 %v1278, %v1277
    %v1304 = vpack.c.b16 %v1280, %v1279
    %v1305 = vpack.c.b16 %v1282, %v1281
    %v1306 = vpack.c.b16 %v1284, %v1283
    %v1307 = vpack.c.b16 %v1286, %v1285
    %v1308 = vpack.c.b16 %v1288, %v1287
    %v1309 = vpack.c.b16 %v1290, %v1289
    %v1310 = vpack.c.b16 %v1292, %v1291
    %v1311 = vpack.c.b16 %v1294, %v1293
    %v1312 = vpack.c.b16 %v1296, %v1295
    %1329 = vmatprep.subr.bf16.mxu0 0
    %1330 = vmatpush1.bf16.msra.mxu0 %v1304
    %1331 = vmatprep.subr.bf16.mxu0 0
    %1332 = vmatpush1.bf16.msra.mxu0 %v1303
    %1333 = vmatprep.subr.bf16.mxu0 0
    %1334 = vmatpush1.bf16.msra.mxu0 %v1302
    %1335 = vmatprep.subr.bf16.mxu0 0
    %1336 = vmatpush1.bf16.msra.mxu0 %v1301
    %1337 = vmatprep.subr.bf16.mxu0 0
    %1338 = vmatpush1.bf16.msra.mxu0 %v1300
    %1339 = vmatprep.subr.bf16.mxu0 0
    %1340 = vmatpush1.bf16.msra.mxu0 %v1299
    %1341 = vmatprep.subr.bf16.mxu0 0
    %1342 = vmatpush1.bf16.msra.mxu0 %v1298
    %1343 = vmatprep.subr.bf16.mxu0 0
    %1344 = vmatpush1.bf16.msra.mxu0 %v1297
    %1345 = vmatprep.subr.bf16.mxu0 0
    %1346 = vmatpush2.bf16.msra.mxu0 %v1312
    %1347 = vmatprep.subr.bf16.mxu0 0
    %1348 = vmatpush2.bf16.msra.mxu0 %v1311
    %1349 = vmatprep.subr.bf16.mxu0 0
    %1350 = vmatpush2.bf16.msra.mxu0 %v1310
    %1351 = vmatprep.subr.bf16.mxu0 0
    %1352 = vmatpush2.bf16.msra.mxu0 %v1309
    %1353 = vmatprep.subr.bf16.mxu0 0
    %1354 = vmatpush2.bf16.msra.mxu0 %v1308
    %1355 = vmatprep.subr.bf16.mxu0 0
    %1356 = vmatpush2.bf16.msra.mxu0 %v1307
    %1357 = vmatprep.subr.bf16.mxu0 0
    %1358 = vmatpush2.bf16.msra.mxu0 %v1306
    %1359 = vmatprep.subr.bf16.mxu0 0
    %1360 = vmatpush2.bf16.msra.mxu0 %v1305
    %1361 = vmatprep.mubr.bf16.mxu0 %v1198
    %1362 = vmatmul.mubr.bf16.gmra.mxu0 %v1197
    %v1363 = vpop.f32.mrf.mxu0
    %v1364 = vadd.f32 0.0, %v1363
    %v1365 = vpop.f32.mrf.mxu0
    %v1366 = vpop.f32.mrf.mxu0
    %v1367 = vadd.f32 0.0, %v1366
    %v1368 = vpop.f32.mrf.mxu0
    %1369 = vmatprep.mubr.bf16.mxu0 %v1200
    %1370 = vmatmul.mubr.bf16.gmra.mxu0 %v1199
    %v1371 = vpop.f32.mrf.mxu0
    %v1372 = vadd.f32 0.0, %v1371
    %v1373 = vpop.f32.mrf.mxu0
    %v1374 = vpop.f32.mrf.mxu0
    %v1375 = vadd.f32 0.0, %v1374
    %v1376 = vpop.f32.mrf.mxu0
    %1377 = vdwg.mxu0
    %1378 = vst [vmem:[#allocation10] sm:$0xff] %v1364
    %1379 = vst [vmem:[#allocation10 + $0x8] sm:$0xff] %v1367
    %1380 = vst [vmem:[#allocation10 + $0x10] sm:$0xff] %v1372
    %1381 = vst [vmem:[#allocation10 + $0x18] sm:$0xff] %v1375
    // Predicated region
    $region34: #{tpu_custom_call.1} parent=1 // pred_check
      _
    $region35: #{tpu_custom_call.1} parent=1 // pred_check_branch
      %1383 = sbr.rel (0) target = $region37
    $region36: #{tpu_custom_call.1} parent=1 // pred_region
      %s1385 = ssub.s32 512, 512
      %1386 = vsyncadd [#allocation4], %s1385
      %s1387 = sshll.u32 [#allocation10], 4
      %s1388 = int_to_ptr.vmem [resolvable:$true] %s1387
      %1393 = dma.vmem_to_hbm [thread:$0]  %s1388, 512, %s4, [#allocation4], 128, 128, 8
    $region37: #{tpu_custom_call.1} parent=1 // pred_fallthru
      _
    // Predicated region
    $region38: #{tpu_custom_call.1} parent=1 // pred_check
      _
    $region39: #{tpu_custom_call.1} parent=1 // pred_check_branch
      %1395 = sbr.rel (0) target = $region41
    $region40: #{tpu_custom_call.1} parent=1 // pred_region
      %1396 = dma.done [#allocation4], 512
    $region41: #{tpu_custom_call.1} parent=1 // pred_fallthru
      _
    %1397 = vsyncpa [#allocation3], 1
    %1398 = vsyncpa [#allocation6], 1
    %1399 = vsyncpa [#allocation9], 1
    %1400 = vsyncpa [#allocation4], 1

</llo_original>
